<compile_context>
chip_gen: v7x
topology: tpu7x:2x2x1
jax: 0.10.0
libtpu: 0.0.40
codegen_flags: <defaults>
</compile_context>

<pallas_src>
import math

import jax
import jax.numpy as jnp
from jax.experimental import pallas as pl
from jax.experimental.pallas import tpu as pltpu


_INV_SQRT2 = 1.0 / math.sqrt(2.0)
_SQRT_2_OVER_PI = math.sqrt(2.0 / math.pi)


def _gelu_erf(x):
    # Exact erf GELU: x * 0.5 * (1 + erf(x / sqrt(2)))  (PyTorch's `gelu`).
    return x * 0.5 * (1.0 + jax.lax.erf(x * _INV_SQRT2))


def _gelu_tanh(x):
    # Tanh approximation (PyTorch's `gelu_new`); tanh runs on the EUP slot.
    return 0.5 * x * (1.0 + jnp.tanh(_SQRT_2_OVER_PI * (x + 0.044715 * (x * x * x))))


def _relu(x):
    return jnp.maximum(x, 0.0)


def _swish(x):
    return x * jax.nn.sigmoid(x)


_ACTIVATIONS = {"gelu": _gelu_erf, "gelu_new": _gelu_tanh, "relu": _relu, "swish": _swish}


def _round_up(x, m):
    return ((x + m - 1) // m) * m


def _pick_chunk(I):
    # Largest lane-aligned chunk (<=512) that divides I; else single chunk.
    for c in (512, 256, 128):
        if I >= c and I % c == 0:
            return c
    return I


def _tpu_info():
    try:
        return pltpu.get_tpu_info()
    except Exception:
        return None


def _vmem_capacity_bytes():
    info = _tpu_info()
    if info is not None:
        cap = getattr(info, "vmem_capacity_bytes", None)
        try:
            cap = int(cap)
            if cap > 0:
                return cap
        except (TypeError, ValueError):
            pass
    return 64 * 2**20  # conservative fallback (v7x-sized) if detection fails


def _num_tensorcores():
    info = _tpu_info()
    if info is not None:
        for name in ("num_cores", "core_count", "num_tensorcores",
                     "cores_per_chip", "tensorcores_per_chip"):
            v = getattr(info, name, None)
            try:
                v = int(v)
            except (TypeError, ValueError):
                continue
            if v > 1:
                return v
    return 1


def _invariant_spec(shape, single_buffer):
    # Grid-invariant block (weight/bias): index never changes, so one buffer
    # is enough -- halves the weight's VMEM residency (matters on v7x).
    index_map = lambda i: (0, 0)
    if single_buffer and hasattr(pl, "Buffered"):
        try:
            return pl.BlockSpec(shape, index_map, pipeline_mode=pl.Buffered(1))
        except TypeError:  # jax version without pipeline_mode on BlockSpec
            pass
    return pl.BlockSpec(shape, index_map)


def _make_kernel(act_fn, compute_dtype, I, ch):
    n_chunks = max(1, I // ch)

    def kernel(x_ref, w_ref, b_ref, o_ref):
        # x_ref: (tm, H) stored dtype; w_ref: (H, I) stored dtype;
        # b_ref: (1, I) f32;           o_ref: (tm, I) out dtype.
        x = x_ref[...]
        if x.dtype != compute_dtype:
            x = x.astype(compute_dtype)          # in-kernel cast (no HBM round trip)
        # Chunk the matmul + f32 epilogue over the I (lane) axis.  The chunk
        # count is static -> fully unrolled, all slice offsets are constant
        # and lane-aligned (multiples of 128).
        for c in range(n_chunks):
            lo = c * ch
            w = w_ref[:, lo:lo + ch]
            if w.dtype != compute_dtype:
                w = w.astype(compute_dtype)
            acc = jnp.dot(x, w, preferred_element_type=jnp.float32)
            acc = acc + b_ref[:, lo:lo + ch]     # bias add + activation in f32
            o_ref[:, lo:lo + ch] = act_fn(acc).astype(o_ref.dtype)

    return kernel


def bert_intermediate(hidden_states, weight, bias, *, hidden_act="gelu",
                      compute_dtype=None, out_dtype=None, tm=None,
                      gelu_approx=None, core_parallel=None):
    """BertIntermediate forward: act(hidden_states @ weight + bias).

    hidden_states: [B, S, H]
    weight:        [H, I] (transpose of PyTorch nn.Linear's [I, H]), in the
                   dtype the caller cached it (f32, or bf16 for the fast path).
    bias:          [I]
    hidden_act:    'gelu' | 'gelu_new' | 'relu' | 'swish' | jnp-traceable callable.
    compute_dtype: dtype fed to the MXU (None -> stored dtype; exact path).
    out_dtype:     output dtype (None -> hidden_states.dtype).
    gelu_approx:   replace erf-GELU with the tanh form ('gelu' only);
                   None -> True only on the low-precision fast path.
    core_parallel: shard rows across TensorCores (None -> auto: only if >1 TC).
    """
    B, S, H = hidden_states.shape
    Hw, I = weight.shape
    assert Hw == H, (Hw, H)
    M = B * S

    out_dtype = jnp.dtype(out_dtype) if out_dtype is not None else jnp.dtype(hidden_states.dtype)
    cdt = jnp.dtype(compute_dtype) if compute_dtype is not None else jnp.dtype(hidden_states.dtype)

    # Activation selection.  Exact path keeps erf (matches PyTorch); the fast
    # path swaps in the tanh approximation so the transcendental uses the EUP.
    if callable(hidden_act):
        act_fn = hidden_act
    else:
        act_fn = _ACTIVATIONS[hidden_act]
    if gelu_approx is None:
        gelu_approx = (compute_dtype is not None and cdt.itemsize < 4)
    if gelu_approx and not callable(hidden_act) and hidden_act == "gelu":
        act_fn = _gelu_tanh

    # No wrapper-side casts of x / weight (would add a full extra HBM pass).
    x2d = hidden_states.reshape(M, H)
    w2d = weight
    b2d = bias.astype(jnp.float32).reshape(1, I)

    # Per-generation VMEM budget and row tile.
    cap = _vmem_capacity_bytes()
    budget = max(24 * 2**20, cap - 16 * 2**20)       # leave Mosaic scratch headroom
    if tm is None:
        tm = 512 if cap >= 96 * 2**20 else 256       # bigger tiles on 128-MiB parts
    tm_eff = max(16, min(_round_up(tm, 16), _round_up(M, 16)))

    ch = _pick_chunk(I)

    def est_vmem(tm_e):
        return (H * I * w2d.dtype.itemsize           # resident weight (1 buffer)
                + I * 4                               # resident bias
                + 2 * tm_e * H * x2d.dtype.itemsize   # streamed x tiles (2 buffers)
                + 2 * tm_e * I * out_dtype.itemsize   # streamed out tiles (2 buffers)
                + 3 * tm_e * ch * 4)                  # f32 acc + epilogue temps

    while tm_eff > 64 and est_vmem(tm_eff) * 5 > budget * 4:   # keep 1.25x headroom
        tm_eff = max(64, _round_up(tm_eff // 2, 16))

    grid = (pl.cdiv(M, tm_eff),)
    vmem_limit = int(min(budget, max(32 * 2**20, (est_vmem(tm_eff) * 3) // 2)))

    cost = pl.CostEstimate(
        flops=2 * M * H * I,
        transcendentals=M * I,
        bytes_accessed=(M * H * x2d.dtype.itemsize + H * I * w2d.dtype.itemsize
                        + I * 4 + M * I * out_dtype.itemsize),
    )

    kernel = _make_kernel(act_fn, cdt, I, ch)

    if core_parallel is None:
        core_parallel = _num_tensorcores() > 1
    if core_parallel and hasattr(pltpu, "CORE_PARALLEL"):
        semantics = (pltpu.CORE_PARALLEL,)   # v7x: actually split rows over the 2 TCs
    else:
        semantics = ("parallel",)            # 1-TC chips: safe default

    def run(single_buffer, sems):
        grid_spec = pltpu.PrefetchScalarGridSpec(
            num_scalar_prefetch=0,
            grid=grid,
            in_specs=[
                pl.BlockSpec((tm_eff, H), lambda i: (i, 0)),        # streamed rows
                _invariant_spec((H, I), single_buffer),             # resident weight
                _invariant_spec((1, I), single_buffer),             # resident bias
            ],
            out_specs=pl.BlockSpec((tm_eff, I), lambda i: (i, 0)),  # lane-dense out
        )
        return pl.pallas_call(
            kernel,
            out_shape=jax.ShapeDtypeStruct((M, I), out_dtype),
            grid_spec=grid_spec,
            compiler_params=pltpu.CompilerParams(
                dimension_semantics=sems,
                vmem_limit_bytes=vmem_limit,
            ),
            cost_estimate=cost,
        )(x2d, w2d, b2d)

    # Preferred config first; one fallback to plain double-buffered weights /
    # "parallel" semantics for versions that reject Buffered(1)/CORE_PARALLEL.
    # Genuine failures (e.g. real VMEM OOM) still surface: the last exception
    # is re-raised if every config fails.
    attempts = [(True, semantics)]
    if semantics != ("parallel",):
        attempts.append((True, ("parallel",)))
    attempts.append((False, ("parallel",)))
    last_exc = None
    for sb, sems in attempts:
        try:
            out2d = run(sb, sems)
            break
        except Exception as e:  # noqa: BLE001 - re-raised below if all configs fail
            last_exc = e
    else:
        raise last_exc

    return out2d.reshape(B, S, I)


def reference(hidden_states, weight, bias):
    h = jnp.einsum("bsh,hi->bsi",
                   hidden_states.astype(jnp.float32),
                   weight.astype(jnp.float32),
                   precision=jax.lax.Precision.HIGHEST) + bias.astype(jnp.float32)
    return _gelu_erf(h)


if __name__ == "__main__":
    key = jax.random.PRNGKey(0)
    kx, kw, kb, kw2, kb2 = jax.random.split(key, 5)

    # Small BERT-like shapes.
    B, S, H, I = 2, 8, 32, 128
    x = jax.random.normal(kx, (B, S, H), dtype=jnp.float32)
    # PyTorch stores nn.Linear weight as [I, H]; we keep the [H, I] transpose.
    w = jax.random.normal(kw, (H, I), dtype=jnp.float32) * (1.0 / math.sqrt(H))
    b = jax.random.normal(kb, (I,), dtype=jnp.float32) * 0.5

    ref = reference(x, w, b)

    # 1) Default path: stored-dtype (f32) compute, exact erf GELU (matches the
    #    PyTorch module).  Tolerance covers the MXU possibly running f32
    #    operands as bf16 passes at DEFAULT precision.
    out = bert_intermediate(x, w, b)
    jax.block_until_ready(out)
    assert out.shape == (B, S, I)
    assert jnp.allclose(out, ref, atol=3e-2, rtol=3e-2), "default path mismatch"

    # 2) Fast path: bf16 weight pre-cast ONCE outside the per-call path, bf16
    #    MXU inputs (f32 accumulation), tanh-approx GELU on the EUP, bf16 out.
    w_bf16 = w.astype(jnp.bfloat16)
    out_fast = bert_intermediate(x, w_bf16, b, compute_dtype=jnp.bfloat16,
                                 out_dtype=jnp.bfloat16)
    jax.block_until_ready(out_fast)
    assert out_fast.shape == (B, S, I) and out_fast.dtype == jnp.bfloat16
    assert jnp.allclose(out_fast.astype(jnp.float32), ref, atol=7e-2, rtol=7e-2), \
        "bf16 fast path mismatch"

    # 3) Wider intermediate to exercise the chunked (multi-slice) epilogue.
    I2 = 1024
    w2 = jax.random.normal(kw2, (H, I2), dtype=jnp.float32) * (1.0 / math.sqrt(H))
    b2 = jax.random.normal(kb2, (I2,), dtype=jnp.float32) * 0.5
    ref2 = reference(x, w2, b2)
    out2 = bert_intermediate(x, w2, b2)
    jax.block_until_ready(out2)
    assert out2.shape == (B, S, I2)
    assert jnp.allclose(out2, ref2, atol=3e-2, rtol=3e-2), "chunked path mismatch"

    print("KERNEL_OK")
</pallas_src>

<mosaic_0001>
module attributes {stable_mosaic.version = 11 : i64} {
  func.func @kernel(%arg0: i32, %arg1: memref<16x32xf32, #tpu.memory_space<vmem>>, %arg2: memref<32x128xf32, #tpu.memory_space<vmem>>, %arg3: memref<1x128xf32, #tpu.memory_space<vmem>>, %arg4: memref<16x128xf32, #tpu.memory_space<vmem>>) attributes {dimension_semantics = [#tpu.dimension_semantics<parallel>], iteration_bounds = array<i64: 1>, scalar_prefetch = 0 : i64, scratch_operands = 0 : i64, tpu.core_type = #tpu.core_type<tc>, window_params = [{transform_indices = @transform_0, window_bounds = array<i64: 16, 32>}, {pipeline_mode = #tpu.pipeline_mode<synchronous>, transform_indices = @transform_1, window_bounds = array<i64: 32, 128>}, {pipeline_mode = #tpu.pipeline_mode<synchronous>, transform_indices = @transform_2, window_bounds = array<i64: 1, 128>}, {transform_indices = @transform_3, window_bounds = array<i64: 16, 128>}]} {
    %c0 = arith.constant 0 : index
    %c0_0 = arith.constant 0 : index
    %0 = vector.load %arg1[%c0, %c0_0] : memref<16x32xf32, #tpu.memory_space<vmem>>, vector<16x32xf32>
    %c0_1 = arith.constant 0 : index
    %c0_2 = arith.constant 0 : index
    %1 = vector.load %arg2[%c0_1, %c0_2] : memref<32x128xf32, #tpu.memory_space<vmem>>, vector<32x128xf32>
    %cst = arith.constant dense<0.000000e+00> : vector<16x128xf32>
    %2 = tpu.matmul %0, %1, %cst {dimension_numbers = #tpu.dot_dimension_numbers<[1], [0], [0], [1], [0, 0, 1, 1], [], []>} : vector<16x32xf32>, vector<32x128xf32>, vector<16x128xf32> -> vector<16x128xf32>
    %c0_3 = arith.constant 0 : index
    %c0_4 = arith.constant 0 : index
    %3 = vector.load %arg3[%c0_3, %c0_4] : memref<1x128xf32, #tpu.memory_space<vmem>>, vector<1x128xf32>
    %4 = vector.broadcast %3 : vector<1x128xf32> to vector<16x128xf32>
    %5 = arith.addf %2, %4 : vector<16x128xf32>
    %cst_5 = arith.constant 5.000000e-01 : f32
    %6 = vector.broadcast %cst_5 : f32 to vector<16x128xf32>
    %7 = arith.mulf %5, %6 : vector<16x128xf32>
    %cst_6 = arith.constant 0.707106769 : f32
    %8 = vector.broadcast %cst_6 : f32 to vector<16x128xf32>
    %9 = arith.mulf %5, %8 : vector<16x128xf32>
    %10 = math.erf %9 : vector<16x128xf32>
    %cst_7 = arith.constant 1.000000e+00 : f32
    %11 = vector.broadcast %cst_7 : f32 to vector<16x128xf32>
    %12 = arith.addf %11, %10 : vector<16x128xf32>
    %13 = arith.mulf %7, %12 : vector<16x128xf32>
    %c0_8 = arith.constant 0 : index
    %c0_9 = arith.constant 0 : index
    %14 = vector.load %arg4[%c0_8, %c0_9] : memref<16x128xf32, #tpu.memory_space<vmem>>, vector<16x128xf32>
    tpu.vector_store %arg4[%c0_8, %c0_9], %13 {strides = array<i32>} : memref<16x128xf32, #tpu.memory_space<vmem>>, vector<16x128xf32>,
    return
  }
  func.func @transform_0(%arg0: i32) -> (i32, i32) {
    %c0_i32 = arith.constant 0 : i32
    %c0_i32_0 = arith.constant 0 : i32
    return %arg0, %c0_i32 : i32, i32
  }
  func.func @transform_1(%arg0: i32) -> (i32, i32) {
    %c0_i32 = arith.constant 0 : i32
    %c0_i32_0 = arith.constant 0 : i32
    %c0_i32_1 = arith.constant 0 : i32
    return %c0_i32, %c0_i32_0 : i32, i32
  }
  func.func @transform_2(%arg0: i32) -> (i32, i32) {
    %c0_i32 = arith.constant 0 : i32
    %c0_i32_0 = arith.constant 0 : i32
    %c0_i32_1 = arith.constant 0 : i32
    return %c0_i32, %c0_i32_0 : i32, i32
  }
  func.func @transform_3(%arg0: i32) -> (i32, i32) {
    %c0_i32 = arith.constant 0 : i32
    %c0_i32_0 = arith.constant 0 : i32
    return %arg0, %c0_i32 : i32, i32
  }
}

module attributes {stable_mosaic.version = 11 : i64} {
  func.func @kernel(%arg0: i32, %arg1: memref<16x32xf32, #tpu.memory_space<vmem>>, %arg2: memref<32x128xf32, #tpu.memory_space<vmem>>, %arg3: memref<1x128xf32, #tpu.memory_space<vmem>>, %arg4: memref<16x128xf32, #tpu.memory_space<vmem>>) attributes {dimension_semantics = [#tpu.dimension_semantics<parallel>], iteration_bounds = array<i64: 1>, scalar_prefetch = 0 : i64, scratch_operands = 0 : i64, tpu.core_type = #tpu.core_type<tc>, window_params = [{transform_indices = @transform_0, window_bounds = array<i64: 16, 32>}, {pipeline_mode = #tpu.pipeline_mode<synchronous>, transform_indices = @transform_1, window_bounds = array<i64: 32, 128>}, {pipeline_mode = #tpu.pipeline_mode<synchronous>, transform_indices = @transform_2, window_bounds = array<i64: 1, 128>}, {transform_indices = @transform_3, window_bounds = array<i64: 16, 128>}]} {
    %c0 = arith.constant 0 : index
    %c0_0 = arith.constant 0 : index
    %0 = vector.load %arg1[%c0, %c0_0] : memref<16x32xf32, #tpu.memory_space<vmem>>, vector<16x32xf32>
    %c0_1 = arith.constant 0 : index
    %c0_2 = arith.constant 0 : index
    %1 = vector.load %arg2[%c0_1, %c0_2] : memref<32x128xf32, #tpu.memory_space<vmem>>, vector<32x128xf32>
    %cst = arith.constant dense<0.000000e+00> : vector<16x128xf32>
    %2 = tpu.matmul %0, %1, %cst {dimension_numbers = #tpu.dot_dimension_numbers<[1], [0], [0], [1], [0, 0, 1, 1], [], []>} : vector<16x32xf32>, vector<32x128xf32>, vector<16x128xf32> -> vector<16x128xf32>
    %c0_3 = arith.constant 0 : index
    %c0_4 = arith.constant 0 : index
    %3 = vector.load %arg3[%c0_3, %c0_4] : memref<1x128xf32, #tpu.memory_space<vmem>>, vector<1x128xf32>
    %4 = vector.broadcast %3 : vector<1x128xf32> to vector<16x128xf32>
    %5 = arith.addf %2, %4 : vector<16x128xf32>
    %cst_5 = arith.constant 5.000000e-01 : f32
    %6 = vector.broadcast %cst_5 : f32 to vector<16x128xf32>
    %7 = arith.mulf %5, %6 : vector<16x128xf32>
    %cst_6 = arith.constant 0.707106769 : f32
    %8 = vector.broadcast %cst_6 : f32 to vector<16x128xf32>
    %9 = arith.mulf %5, %8 : vector<16x128xf32>
    %10 = math.erf %9 : vector<16x128xf32>
    %cst_7 = arith.constant 1.000000e+00 : f32
    %11 = vector.broadcast %cst_7 : f32 to vector<16x128xf32>
    %12 = arith.addf %11, %10 : vector<16x128xf32>
    %13 = arith.mulf %7, %12 : vector<16x128xf32>
    %c0_8 = arith.constant 0 : index
    %c0_9 = arith.constant 0 : index
    %14 = vector.load %arg4[%c0_8, %c0_9] : memref<16x128xf32, #tpu.memory_space<vmem>>, vector<16x128xf32>
    tpu.vector_store %arg4[%c0_8, %c0_9], %13 {strides = array<i32>} : memref<16x128xf32, #tpu.memory_space<vmem>>, vector<16x128xf32>,
    return
  }
  func.func @transform_0(%arg0: i32) -> (i32, i32) {
    %c0_i32 = arith.constant 0 : i32
    %c0_i32_0 = arith.constant 0 : i32
    return %arg0, %c0_i32 : i32, i32
  }
  func.func @transform_1(%arg0: i32) -> (i32, i32) {
    %c0_i32 = arith.constant 0 : i32
    %c0_i32_0 = arith.constant 0 : i32
    %c0_i32_1 = arith.constant 0 : i32
    return %c0_i32, %c0_i32_0 : i32, i32
  }
  func.func @transform_2(%arg0: i32) -> (i32, i32) {
    %c0_i32 = arith.constant 0 : i32
    %c0_i32_0 = arith.constant 0 : i32
    %c0_i32_1 = arith.constant 0 : i32
    return %c0_i32, %c0_i32_0 : i32, i32
  }
  func.func @transform_3(%arg0: i32) -> (i32, i32) {
    %c0_i32 = arith.constant 0 : i32
    %c0_i32_0 = arith.constant 0 : i32
    return %arg0, %c0_i32 : i32, i32
  }
}

</mosaic_0001>

<llo_original>
// kernel: tpu_custom_call.1
$region0: #{tpu_custom_call.1}
  #allocation0 [shape = 'u32[]', space=smem, size = 0x4, offset = 0x4, fixed_abs, tag = 'smem constant byte address 0x4 - core index']
  #allocation1 [shape = 'u32[144,128]{1,0:T(1,128)}', space=vmem, size = 0x12000, scoped, tag = 'internal scratch']
  %s0 = inlined_call_operand.hbm [shape: f32[16,32], index: 0, kind: input, shape index: {}]
  %s1 = inlined_call_operand.hbm [shape: f32[32,128], index: 1, kind: input, shape index: {}]
  %s2 = inlined_call_operand.vmem [shape: f32[1,128], index: 2, kind: input, shape index: {}]
  %s3 = inlined_call_operand.hbm [shape: f32[16,128], index: 3, kind: output, shape index: {}]
  %s4 = sld [smem:[#allocation0]]
  $region30: #{tpu_custom_call.1} parent=0
    _
  %s6 = ssub.s32 1, %s4
  %s7 = scalar_select 0, %s6, %s4
  $region1: #{tpu_custom_call.1} parent=0
    #allocation2 [shape = 'u8[8192]{0}', space=vmem, size = 0x2000, scoped, tag = 'input window, operand 0, single buffered']
    #allocation3 [shape = 's32[1]{0}', space=sflag, size = 0x4, scoped, tag = 'scoped memory for tpu_custom_call.1']
    #allocation4 [shape = 's32[1]{0}', space=sflag, size = 0x4, scoped, tag = 'scoped memory for tpu_custom_call.1']
    #allocation5 [shape = 'u8[16384]{0}', space=vmem, size = 0x4000, scoped, tag = 'input window, operand 1, single buffered']
    #allocation6 [shape = 's32[1]{0}', space=sflag, size = 0x4, scoped, tag = 'scoped memory for tpu_custom_call.1']
    #allocation7 [shape = 'u8[8192]{0}', space=vmem, size = 0x2000, scoped, tag = 'output window, operand 0, single buffered']
    %8 = vsyncpa [#allocation3], 0
    %9 = vsyncpa [#allocation6], 0
    %10 = vsyncpa [#allocation4], 0
    // Predicated region
    $region2: #{tpu_custom_call.1} parent=1 // pred_check
      _
    $region3: #{tpu_custom_call.1} parent=1 // pred_check_branch
      %12 = sbr.rel (0) target = $region5
    $region4: #{tpu_custom_call.1} parent=1 // pred_region
      %s14 = ssub.s32 256, 256
      %15 = vsyncadd [#allocation3], %s14
      %s16 = sshll.u32 [#allocation2], 4
      %s17 = int_to_ptr.vmem [resolvable:$true] %s16
      %22 = dma.hbm_to_vmem [thread:$0]  %s0, 256, %s17, [#allocation3], 128, 128, 8
    $region5: #{tpu_custom_call.1} parent=1 // pred_fallthru
      _
    // Predicated region
    $region6: #{tpu_custom_call.1} parent=1 // pred_check
      _
    $region7: #{tpu_custom_call.1} parent=1 // pred_check_branch
      %24 = sbr.rel (0) target = $region9
    $region8: #{tpu_custom_call.1} parent=1 // pred_region
      %s26 = ssub.s32 512, 512
      %27 = vsyncadd [#allocation6], %s26
      %s28 = sshll.u32 [#allocation5], 4
      %s29 = int_to_ptr.vmem [resolvable:$true] %s28
      %34 = dma.hbm_to_vmem [thread:$0]  %s1, 512, %s29, [#allocation6], 128, 128, 8
    $region9: #{tpu_custom_call.1} parent=1 // pred_fallthru
      _
    // Predicated region
    $region10: #{tpu_custom_call.1} parent=1 // pred_check
      _
    $region11: #{tpu_custom_call.1} parent=1 // pred_check_branch
      %36 = sbr.rel (0) target = $region13
    $region12: #{tpu_custom_call.1} parent=1 // pred_region
      _
    $region13: #{tpu_custom_call.1} parent=1 // pred_fallthru
      _
    // Predicated region
    $region14: #{tpu_custom_call.1} parent=1 // pred_check
      _
    $region15: #{tpu_custom_call.1} parent=1 // pred_check_branch
      %38 = sbr.rel (0) target = $region17
    $region16: #{tpu_custom_call.1} parent=1 // pred_region
      %39 = dma.done [#allocation3], 256
    $region17: #{tpu_custom_call.1} parent=1 // pred_fallthru
      _
    // Predicated region
    $region18: #{tpu_custom_call.1} parent=1 // pred_check
      _
    $region19: #{tpu_custom_call.1} parent=1 // pred_check_branch
      %41 = sbr.rel (0) target = $region21
    $region20: #{tpu_custom_call.1} parent=1 // pred_region
      %42 = dma.done [#allocation6], 512
    $region21: #{tpu_custom_call.1} parent=1 // pred_fallthru
      _
    %v43 = vld [vmem:[#allocation2] sm:$0xff]
    %v44 = vld [vmem:[#allocation2 + $0x8] sm:$0xff]
    %v45 = vld [vmem:[#allocation5] sm:$0xff]
    %v46 = vld [vmem:[#allocation5 + $0x8] sm:$0xff]
    %v47 = vld [vmem:[#allocation5 + $0x10] sm:$0xff]
    %v48 = vld [vmem:[#allocation5 + $0x18] sm:$0xff]
    %v49 = vld [vmem:[%s2] sm:$0x1]
    %v51 = vlaneseq
    %v52 = vshrl.u32 %v51, 7
    %v53 = vsub.s32 0, %v52
    %v54 = vrot.slane %v49, %v53
    %vm56 = vcmask 261120
    %v58 = vsel %vm56, %v43, 0
    %v61 = vsel %vm56, %v44, 0
    %63 = vmatprep.subr.mxu0 0.0
    %64 = vmatpush1.msra.mxu0 %v45
    %65 = vmatprep.subr.mxu0 0.0
    %66 = vmatpush1.msra.mxu0 %v46
    %67 = vmatprep.subr.mxu0 0.0
    %68 = vmatpush1.msra.mxu0 %v47
    %69 = vmatprep.subr.mxu0 0.0
    %70 = vmatpush1.msra.mxu0 %v48
    %71 = vmatprep.subr.mxu0 0.0
    %72 = vmatpush1.msra.mxu0 0.0
    %73 = vmatprep.subr.mxu0 0.0
    %74 = vmatpush1.msra.mxu0 0.0
    %75 = vmatprep.subr.mxu0 0.0
    %76 = vmatpush1.msra.mxu0 0.0
    %77 = vmatprep.subr.mxu0 0.0
    %78 = vmatpush1.msra.mxu0 0.0
    %79 = vmatprep.subr.mxu0 0.0
    %80 = vmatpush1.msra.mxu0 0.0
    %81 = vmatprep.subr.mxu0 0.0
    %82 = vmatpush1.msra.mxu0 0.0
    %83 = vmatprep.subr.mxu0 0.0
    %84 = vmatpush1.msra.mxu0 0.0
    %85 = vmatprep.subr.mxu0 0.0
    %86 = vmatpush1.msra.mxu0 0.0
    %87 = vmatprep.subr.mxu0 0.0
    %88 = vmatpush1.msra.mxu0 0.0
    %89 = vmatprep.subr.mxu0 0.0
    %90 = vmatpush1.msra.mxu0 0.0
    %91 = vmatprep.subr.mxu0 0.0
    %92 = vmatpush1.msra.mxu0 0.0
    %93 = vmatprep.subr.mxu0 0.0
    %94 = vmatpush1.msra.mxu0 0.0
    %95 = vmatprep.subr.mxu0 0.0
    %96 = vmatpush1.msra.mxu0 0.0
    %97 = vmatprep.subr.mxu0 0.0
    %98 = vmatpush1.msra.mxu0 0.0
    %99 = vmatprep.subr.mxu0 0.0
    %100 = vmatpush1.msra.mxu0 0.0
    %101 = vmatprep.subr.mxu0 0.0
    %102 = vmatpush1.msra.mxu0 0.0
    %103 = vmatprep.subr.mxu0 0.0
    %104 = vmatpush1.msra.mxu0 0.0
    %105 = vmatprep.subr.mxu0 0.0
    %106 = vmatpush1.msra.mxu0 0.0
    %107 = vmatprep.subr.mxu0 0.0
    %108 = vmatpush1.msra.mxu0 0.0
    %109 = vmatprep.subr.mxu0 0.0
    %110 = vmatpush1.msra.mxu0 0.0
    %111 = vmatprep.subr.mxu0 0.0
    %112 = vmatpush1.msra.mxu0 0.0
    %113 = vmatprep.subr.mxu0 0.0
    %114 = vmatpush1.msra.mxu0 0.0
    %115 = vmatprep.subr.mxu0 0.0
    %116 = vmatpush1.msra.mxu0 0.0
    %117 = vmatprep.subr.mxu0 0.0
    %118 = vmatpush1.msra.mxu0 0.0
    %119 = vmatprep.subr.mxu0 0.0
    %120 = vmatpush1.msra.mxu0 0.0
    %121 = vmatprep.subr.mxu0 0.0
    %122 = vmatpush1.msra.mxu0 0.0
    %123 = vmatprep.subr.mxu0 0.0
    %124 = vmatpush1.msra.mxu0 0.0
    %125 = vmatprep.subr.mxu0 0.0
    %126 = vmatpush1.msra.mxu0 0.0
    %127 = vmatprep.mubr.f32.mxu0 0.0
    %128 = vmatmul.mubr.f32.gmra.mrb[0].mxu0 %v58
    %v129 = vpop.f32.mrb[0].mxu0
    %v130 = vadd.f32 %v54, %v129
    %v131 = vpop.f32.mrb[0].mxu0
    %132 = vmatprep.mubr.f32.mxu0 0.0
    %133 = vmatmul.mubr.f32.gmra.mrb[0].mxu0 %v61
    %v134 = vpop.f32.mrb[0].mxu0
    %v135 = vadd.f32 %v54, %v134
    %v136 = vpop.f32.mrb[0].mxu0
    %137 = vdwg.mxu0
    %v138 = vmul.f32 %v130, 0.5
    %v139 = vmul.f32 %v135, 0.5
    %v140 = vmul.f32 %v130, 0.70710677
    %v141 = vmul.f32 %v135, 0.70710677
    %v142 = verf.f32.pop %v140
    %v143 = verf.f32.pop %v141
    %v144 = vadd.f32 %v142, 1.0
    %v145 = vadd.f32 %v143, 1.0
    %v146 = vmul.f32 %v138, %v144
    %v147 = vmul.f32 %v139, %v145
    %148 = vst [vmem:[#allocation7] sm:$0xff] %v146
    %149 = vst [vmem:[#allocation7 + $0x8] sm:$0xff] %v147
    // Predicated region
    $region22: #{tpu_custom_call.1} parent=1 // pred_check
      _
    $region23: #{tpu_custom_call.1} parent=1 // pred_check_branch
      %151 = sbr.rel (0) target = $region25
    $region24: #{tpu_custom_call.1} parent=1 // pred_region
      %s153 = ssub.s32 256, 256
      %154 = vsyncadd [#allocation4], %s153
      %s155 = sshll.u32 [#allocation7], 4
      %s156 = int_to_ptr.vmem [resolvable:$true] %s155
      %161 = dma.vmem_to_hbm [thread:$0]  %s156, 256, %s3, [#allocation4], 128, 128, 8
    $region25: #{tpu_custom_call.1} parent=1 // pred_fallthru
      _
    // Predicated region
    $region26: #{tpu_custom_call.1} parent=1 // pred_check
      _
    $region27: #{tpu_custom_call.1} parent=1 // pred_check_branch
      %163 = sbr.rel (0) target = $region29
    $region28: #{tpu_custom_call.1} parent=1 // pred_region
      %164 = dma.done [#allocation4], 256
    $region29: #{tpu_custom_call.1} parent=1 // pred_fallthru
      _
    %165 = vsyncpa [#allocation3], 1
    %166 = vsyncpa [#allocation6], 1
    %167 = vsyncpa [#allocation4], 1

// kernel: tpu_custom_call.1
$region0: #{tpu_custom_call.1}
  #allocation0 [shape = 'u32[]', space=smem, size = 0x4, offset = 0x4, fixed_abs, tag = 'smem constant byte address 0x4 - core index']
  #allocation1 [shape = 'u32[144,128]{1,0:T(1,128)}', space=vmem, size = 0x12000, scoped, tag = 'internal scratch']
  %s0 = inlined_call_operand.hbm [shape: f32[16,32], index: 0, kind: input, shape index: {}]
  %s1 = inlined_call_operand.hbm [shape: f32[32,128], index: 1, kind: input, shape index: {}]
  %s2 = inlined_call_operand.vmem [shape: f32[1,128], index: 2, kind: input, shape index: {}]
  %s3 = inlined_call_operand.hbm [shape: f32[16,128], index: 3, kind: output, shape index: {}]
  %s4 = sld [smem:[#allocation0]]
  $region30: #{tpu_custom_call.1} parent=0
    _
  %s6 = ssub.s32 1, %s4
  %s7 = scalar_select 0, %s6, %s4
  $region1: #{tpu_custom_call.1} parent=0
    #allocation2 [shape = 'u8[8192]{0}', space=vmem, size = 0x2000, scoped, tag = 'input window, operand 0, single buffered']
    #allocation3 [shape = 's32[1]{0}', space=sflag, size = 0x4, scoped, tag = 'scoped memory for tpu_custom_call.1']
    #allocation4 [shape = 's32[1]{0}', space=sflag, size = 0x4, scoped, tag = 'scoped memory for tpu_custom_call.1']
    #allocation5 [shape = 'u8[16384]{0}', space=vmem, size = 0x4000, scoped, tag = 'input window, operand 1, single buffered']
    #allocation6 [shape = 's32[1]{0}', space=sflag, size = 0x4, scoped, tag = 'scoped memory for tpu_custom_call.1']
    #allocation7 [shape = 'u8[8192]{0}', space=vmem, size = 0x2000, scoped, tag = 'output window, operand 0, single buffered']
    %8 = vsyncpa [#allocation3], 0
    %9 = vsyncpa [#allocation6], 0
    %10 = vsyncpa [#allocation4], 0
    // Predicated region
    $region2: #{tpu_custom_call.1} parent=1 // pred_check
      _
    $region3: #{tpu_custom_call.1} parent=1 // pred_check_branch
      %12 = sbr.rel (0) target = $region5
    $region4: #{tpu_custom_call.1} parent=1 // pred_region
      %s14 = ssub.s32 256, 256
      %15 = vsyncadd [#allocation3], %s14
      %s16 = sshll.u32 [#allocation2], 4
      %s17 = int_to_ptr.vmem [resolvable:$true] %s16
      %22 = dma.hbm_to_vmem [thread:$0]  %s0, 256, %s17, [#allocation3], 128, 128, 8
    $region5: #{tpu_custom_call.1} parent=1 // pred_fallthru
      _
    // Predicated region
    $region6: #{tpu_custom_call.1} parent=1 // pred_check
      _
    $region7: #{tpu_custom_call.1} parent=1 // pred_check_branch
      %24 = sbr.rel (0) target = $region9
    $region8: #{tpu_custom_call.1} parent=1 // pred_region
      %s26 = ssub.s32 512, 512
      %27 = vsyncadd [#allocation6], %s26
      %s28 = sshll.u32 [#allocation5], 4
      %s29 = int_to_ptr.vmem [resolvable:$true] %s28
      %34 = dma.hbm_to_vmem [thread:$0]  %s1, 512, %s29, [#allocation6], 128, 128, 8
    $region9: #{tpu_custom_call.1} parent=1 // pred_fallthru
      _
    // Predicated region
    $region10: #{tpu_custom_call.1} parent=1 // pred_check
      _
    $region11: #{tpu_custom_call.1} parent=1 // pred_check_branch
      %36 = sbr.rel (0) target = $region13
    $region12: #{tpu_custom_call.1} parent=1 // pred_region
      _
    $region13: #{tpu_custom_call.1} parent=1 // pred_fallthru
      _
    // Predicated region
    $region14: #{tpu_custom_call.1} parent=1 // pred_check
      _
    $region15: #{tpu_custom_call.1} parent=1 // pred_check_branch
      %38 = sbr.rel (0) target = $region17
    $region16: #{tpu_custom_call.1} parent=1 // pred_region
      %39 = dma.done [#allocation3], 256
    $region17: #{tpu_custom_call.1} parent=1 // pred_fallthru
      _
    // Predicated region
    $region18: #{tpu_custom_call.1} parent=1 // pred_check
      _
    $region19: #{tpu_custom_call.1} parent=1 // pred_check_branch
      %41 = sbr.rel (0) target = $region21
    $region20: #{tpu_custom_call.1} parent=1 // pred_region
      %42 = dma.done [#allocation6], 512
    $region21: #{tpu_custom_call.1} parent=1 // pred_fallthru
      _
    %v43 = vld [vmem:[#allocation2] sm:$0xff]
    %v44 = vld [vmem:[#allocation2 + $0x8] sm:$0xff]
    %v45 = vld [vmem:[#allocation5] sm:$0xff]
    %v46 = vld [vmem:[#allocation5 + $0x8] sm:$0xff]
    %v47 = vld [vmem:[#allocation5 + $0x10] sm:$0xff]
    %v48 = vld [vmem:[#allocation5 + $0x18] sm:$0xff]
    %v49 = vld [vmem:[%s2] sm:$0x1]
    %v51 = vlaneseq
    %v52 = vshrl.u32 %v51, 7
    %v53 = vsub.s32 0, %v52
    %v54 = vrot.slane %v49, %v53
    %vm56 = vcmask 261120
    %v58 = vsel %vm56, %v43, 0
    %v61 = vsel %vm56, %v44, 0
    %63 = vmatprep.subr.mxu0 0.0
    %64 = vmatpush1.msra.mxu0 %v45
    %65 = vmatprep.subr.mxu0 0.0
    %66 = vmatpush1.msra.mxu0 %v46
    %67 = vmatprep.subr.mxu0 0.0
    %68 = vmatpush1.msra.mxu0 %v47
    %69 = vmatprep.subr.mxu0 0.0
    %70 = vmatpush1.msra.mxu0 %v48
    %71 = vmatprep.subr.mxu0 0.0
    %72 = vmatpush1.msra.mxu0 0.0
    %73 = vmatprep.subr.mxu0 0.0
    %74 = vmatpush1.msra.mxu0 0.0
    %75 = vmatprep.subr.mxu0 0.0
    %76 = vmatpush1.msra.mxu0 0.0
    %77 = vmatprep.subr.mxu0 0.0
    %78 = vmatpush1.msra.mxu0 0.0
    %79 = vmatprep.subr.mxu0 0.0
    %80 = vmatpush1.msra.mxu0 0.0
    %81 = vmatprep.subr.mxu0 0.0
    %82 = vmatpush1.msra.mxu0 0.0
    %83 = vmatprep.subr.mxu0 0.0
    %84 = vmatpush1.msra.mxu0 0.0
    %85 = vmatprep.subr.mxu0 0.0
    %86 = vmatpush1.msra.mxu0 0.0
    %87 = vmatprep.subr.mxu0 0.0
    %88 = vmatpush1.msra.mxu0 0.0
    %89 = vmatprep.subr.mxu0 0.0
    %90 = vmatpush1.msra.mxu0 0.0
    %91 = vmatprep.subr.mxu0 0.0
    %92 = vmatpush1.msra.mxu0 0.0
    %93 = vmatprep.subr.mxu0 0.0
    %94 = vmatpush1.msra.mxu0 0.0
    %95 = vmatprep.subr.mxu0 0.0
    %96 = vmatpush1.msra.mxu0 0.0
    %97 = vmatprep.subr.mxu0 0.0
    %98 = vmatpush1.msra.mxu0 0.0
    %99 = vmatprep.subr.mxu0 0.0
    %100 = vmatpush1.msra.mxu0 0.0
    %101 = vmatprep.subr.mxu0 0.0
    %102 = vmatpush1.msra.mxu0 0.0
    %103 = vmatprep.subr.mxu0 0.0
    %104 = vmatpush1.msra.mxu0 0.0
    %105 = vmatprep.subr.mxu0 0.0
    %106 = vmatpush1.msra.mxu0 0.0
    %107 = vmatprep.subr.mxu0 0.0
    %108 = vmatpush1.msra.mxu0 0.0
    %109 = vmatprep.subr.mxu0 0.0
    %110 = vmatpush1.msra.mxu0 0.0
    %111 = vmatprep.subr.mxu0 0.0
    %112 = vmatpush1.msra.mxu0 0.0
    %113 = vmatprep.subr.mxu0 0.0
    %114 = vmatpush1.msra.mxu0 0.0
    %115 = vmatprep.subr.mxu0 0.0
    %116 = vmatpush1.msra.mxu0 0.0
    %117 = vmatprep.subr.mxu0 0.0
    %118 = vmatpush1.msra.mxu0 0.0
    %119 = vmatprep.subr.mxu0 0.0
    %120 = vmatpush1.msra.mxu0 0.0
    %121 = vmatprep.subr.mxu0 0.0
    %122 = vmatpush1.msra.mxu0 0.0
    %123 = vmatprep.subr.mxu0 0.0
    %124 = vmatpush1.msra.mxu0 0.0
    %125 = vmatprep.subr.mxu0 0.0
    %126 = vmatpush1.msra.mxu0 0.0
    %127 = vmatprep.mubr.f32.mxu0 0.0
    %128 = vmatmul.mubr.f32.gmra.mrb[0].mxu0 %v58
    %v129 = vpop.f32.mrb[0].mxu0
    %v130 = vadd.f32 %v54, %v129
    %v131 = vpop.f32.mrb[0].mxu0
    %132 = vmatprep.mubr.f32.mxu0 0.0
    %133 = vmatmul.mubr.f32.gmra.mrb[0].mxu0 %v61
    %v134 = vpop.f32.mrb[0].mxu0
    %v135 = vadd.f32 %v54, %v134
    %v136 = vpop.f32.mrb[0].mxu0
    %137 = vdwg.mxu0
    %v138 = vmul.f32 %v130, 0.5
    %v139 = vmul.f32 %v135, 0.5
    %v140 = vmul.f32 %v130, 0.70710677
    %v141 = vmul.f32 %v135, 0.70710677
    %v142 = verf.f32.pop %v140
    %v143 = verf.f32.pop %v141
    %v144 = vadd.f32 %v142, 1.0
    %v145 = vadd.f32 %v143, 1.0
    %v146 = vmul.f32 %v138, %v144
    %v147 = vmul.f32 %v139, %v145
    %148 = vst [vmem:[#allocation7] sm:$0xff] %v146
    %149 = vst [vmem:[#allocation7 + $0x8] sm:$0xff] %v147
    // Predicated region
    $region22: #{tpu_custom_call.1} parent=1 // pred_check
      _
    $region23: #{tpu_custom_call.1} parent=1 // pred_check_branch
      %151 = sbr.rel (0) target = $region25
    $region24: #{tpu_custom_call.1} parent=1 // pred_region
      %s153 = ssub.s32 256, 256
      %154 = vsyncadd [#allocation4], %s153
      %s155 = sshll.u32 [#allocation7], 4
      %s156 = int_to_ptr.vmem [resolvable:$true] %s155
      %161 = dma.vmem_to_hbm [thread:$0]  %s156, 256, %s3, [#allocation4], 128, 128, 8
    $region25: #{tpu_custom_call.1} parent=1 // pred_fallthru
      _
    // Predicated region
    $region26: #{tpu_custom_call.1} parent=1 // pred_check
      _
    $region27: #{tpu_custom_call.1} parent=1 // pred_check_branch
      %163 = sbr.rel (0) target = $region29
    $region28: #{tpu_custom_call.1} parent=1 // pred_region
      %164 = dma.done [#allocation4], 256
    $region29: #{tpu_custom_call.1} parent=1 // pred_fallthru
      _
    %165 = vsyncpa [#allocation3], 1
    %166 = vsyncpa [#allocation6], 1
    %167 = vsyncpa [#allocation4], 1

</llo_original>
